<compile_context>
chip_gen: v5e
topology: v5e:2x2
jax: 0.10.0
libtpu: 0.0.40
codegen_flags: <defaults>
</compile_context>

<pallas_src>
import jax
import jax.numpy as jnp
from jax.experimental import pallas as pl
from jax.experimental.pallas import tpu as pltpu


def _llama_mlp_kernel(x_ref, wg_ref, wu_ref, wd_ref, o_ref, acc_ref):
    # x_ref:   (tm, H)      token tile (resident across k)
    # wg_ref:  (H, ti)      gate_proj weight tile
    # wu_ref:  (H, ti)      up_proj weight tile
    # wd_ref:  (ti, H)      down_proj weight tile
    # o_ref:   (tm, H)      output tile (written on the last k step)
    # acc_ref: (tm, H) f32  down_proj accumulator (VMEM scratch)
    k = pl.program_id(1)

    @pl.when(k == 0)
    def _():
        acc_ref[...] = jnp.zeros_like(acc_ref)

    x = x_ref[...]
    gate = jnp.dot(x, wg_ref[...], preferred_element_type=jnp.float32)
    up = jnp.dot(x, wu_ref[...], preferred_element_type=jnp.float32)

    # SiLU(gate) = gate * sigmoid(gate) = gate / (1 + exp(-gate)).
    # exp and approx-reciprocal both run in the EUP slot -> pure filler while
    # the MXU streams; keeps the elementwise epilogue off the VALU.
    silu = gate * pl.reciprocal(1.0 + jnp.exp(-gate), approx=True)
    hidden = silu * up

    acc_ref[...] += jnp.dot(hidden.astype(wd_ref.dtype), wd_ref[...],
                            preferred_element_type=jnp.float32)

    @pl.when(k == pl.num_programs(1) - 1)
    def _():
        o_ref[...] = acc_ref[...].astype(o_ref.dtype)


def _cdiv(a, b):
    return -(-a // b)


def _round_up(x, m):
    return _cdiv(x, m) * m


def _sublane_align(dtype):
    # Sub-32-bit dtypes pack along sublanes: 8 rows f32, 16 bf16, 32 int8/fp8.
    return max(8, 32 // jnp.dtype(dtype).itemsize)


def _ti_candidates(I):
    """Valid intermediate tiles: lane-aligned (x128) divisors of I, plus I."""
    cands = {I}
    if I % 128 == 0:
        base = I // 128
        for d in range(1, base + 1):
            if base % d == 0:
                cands.add(d * 128)
    return sorted(cands, reverse=True)


def _vmem_bytes(tm, ti, H, act_bytes, w_bytes):
    """VMEM plan estimate, including compiler-managed temporaries."""
    return (2 * tm * H * act_bytes          # x tiles (double-buffered)
            + 2 * 2 * H * ti * w_bytes      # gate + up weight tiles
            + 2 * ti * H * w_bytes          # down_proj weight tiles
            + 2 * tm * H * act_bytes        # output tiles
            + tm * H * 4                    # f32 accumulator scratch
            + 3 * tm * ti * 4               # gate / up / hidden f32 temporaries
            + tm * ti * w_bytes)            # hidden cast to weight dtype


def llama_mlp(x, w_gate, w_up, w_down, *, tm=None, ti=None):
    """x: [B, S, H]; w_gate/w_up: [H, I]; w_down: [I, H] -> [B, S, H]."""
    B, S, H = x.shape
    I = w_gate.shape[1]
    assert w_up.shape == (H, I) and w_down.shape == (I, H)
    M = B * S

    act_bytes = jnp.dtype(x.dtype).itemsize
    w_bytes = jnp.dtype(w_gate.dtype).itemsize
    align = _sublane_align(x.dtype)

    # ---- generation-aware defaults ------------------------------------
    try:
        vmem_cap = int(pltpu.get_tpu_info().vmem_capacity_bytes)
    except Exception:
        vmem_cap = 64 * 1024 * 1024          # conservative: v7x per-TC budget
    small_vmem = vmem_cap <= 64 * 1024 * 1024

    # Weight streaming dominates: arithmetic intensity ~ tm flops/byte, so tm
    # should sit above the chip ridge (v5e ~240, v7x ~310, v6e ~650).  ti only
    # amortizes per-step overhead, so it is the knob to shrink when VMEM is
    # tight (v7x) — never tm.
    tm_target = tm if tm is not None else (512 if small_vmem else 1024)
    ti_target = ti if ti is not None else (256 if small_vmem else 512)

    # ---- token tile: sublane-aligned; keep >= 2 parallel steps ---------
    tm = max(align, _round_up(min(tm_target, _round_up(M, align)), align))
    if _cdiv(M, tm) < 2 and M > align:       # megacore: keep both TCs busy
        tm = max(align, _round_up(_cdiv(M, 2), align))

    # ---- intermediate tile: lane-aligned divisor of I -------------------
    ti_cands = _ti_candidates(I)
    ti = next((c for c in ti_cands if c <= ti_target), ti_cands[-1])

    # ---- shrink until the plan fits the per-core VMEM budget ------------
    budget = int(0.85 * vmem_cap)
    while _vmem_bytes(tm, ti, H, act_bytes, w_bytes) > budget:
        smaller = [c for c in ti_cands if c < ti]
        if smaller:
            ti = smaller[0]
        elif tm > align:
            tm = max(align, (tm // 2) // align * align)
        else:
            break                             # degenerate shape; let Mosaic decide

    nk = I // ti
    M_pad = _round_up(M, tm)
    gm = M_pad // tm

    x2 = x.reshape(M, H)
    if M_pad != M:
        x2 = jnp.pad(x2, ((0, M_pad - M), (0, 0)))   # zero rows -> zero outputs

    vmem_est = _vmem_bytes(tm, ti, H, act_bytes, w_bytes)
    vmem_limit = int(min(max(int(1.5 * vmem_est), 32 * 1024 * 1024),
                         int(0.9 * vmem_cap)))

    cost = pl.CostEstimate(
        flops=6 * M_pad * H * I,                      # gate + up + down matmuls
        transcendentals=M_pad * I,                    # exp in SiLU
        bytes_accessed=(2 * M_pad * H * act_bytes     # x in + out
                        + gm * 3 * H * I * w_bytes),  # streamed weights
    )

    out2 = pl.pallas_call(
        _llama_mlp_kernel,
        out_shape=jax.ShapeDtypeStruct((M_pad, H), x.dtype),
        grid_spec=pltpu.PrefetchScalarGridSpec(
            num_scalar_prefetch=0,
            grid=(gm, nk),
            in_specs=[
                pl.BlockSpec((tm, H), lambda i, k: (i, 0)),   # x (resident over k)
                pl.BlockSpec((H, ti), lambda i, k: (0, k)),   # gate_proj tile
                pl.BlockSpec((H, ti), lambda i, k: (0, k)),   # up_proj tile
                pl.BlockSpec((ti, H), lambda i, k: (k, 0)),   # down_proj tile
            ],
            out_specs=pl.BlockSpec((tm, H), lambda i, k: (i, 0)),
            scratch_shapes=[pltpu.VMEM((tm, H), jnp.float32)],
        ),
        compiler_params=pltpu.CompilerParams(
            dimension_semantics=("parallel", "arbitrary"),
            vmem_limit_bytes=vmem_limit,
        ),
        cost_estimate=cost,
    )(x2, w_gate, w_up, w_down)

    if M_pad != M:
        out2 = out2[:M]
    return out2.reshape(B, S, H)


if __name__ == "__main__":
    # Small shapes (multiples of 128 on H/I so blocks are lane-aligned).
    batch, seq, hidden, intermediate = 2, 64, 128, 256

    key = jax.random.PRNGKey(0)
    kx, kg, ku, kd = jax.random.split(key, 4)

    x = jax.random.normal(kx, (batch, seq, hidden), dtype=jnp.float32)
    # nn.Linear weights are [out, in]; stored transposed here (x @ W layout).
    w_gate = jax.random.normal(kg, (hidden, intermediate), dtype=jnp.float32) * 0.05
    w_up = jax.random.normal(ku, (hidden, intermediate), dtype=jnp.float32) * 0.05
    w_down = jax.random.normal(kd, (intermediate, hidden), dtype=jnp.float32) * 0.05

    # Explicit small tiles so both grid axes have >1 step (exercises the
    # accumulate-over-I path); real shapes use the generation-aware defaults.
    out = jax.block_until_ready(llama_mlp(x, w_gate, w_up, w_down, tm=64, ti=128))

    # Pure-JAX reference (same math as the PyTorch forward, tp==1 path).
    gate = x @ w_gate
    ref = (gate * jax.nn.sigmoid(gate) * (x @ w_up)) @ w_down
    assert out.shape == (batch, seq, hidden)
    assert jnp.allclose(out, ref, atol=5e-3, rtol=5e-3), \
        float(jnp.max(jnp.abs(out - ref)))

    # bf16 end-to-end path with auto (generation-aware) tiling — matches the
    # recommended production configuration on v5e/v6e/v7x.
    xb, wgb, wub, wdb = (a.astype(jnp.bfloat16) for a in (x, w_gate, w_up, w_down))
    out_b = jax.block_until_ready(llama_mlp(xb, wgb, wub, wdb))
    x2b = xb.reshape(-1, hidden)
    gate_b = jnp.dot(x2b, wgb, preferred_element_type=jnp.float32)
    up_b = jnp.dot(x2b, wub, preferred_element_type=jnp.float32)
    hid_b = (gate_b * jax.nn.sigmoid(gate_b) * up_b).astype(jnp.bfloat16)
    ref_b = jnp.dot(hid_b, wdb, preferred_element_type=jnp.float32)
    ref_b = ref_b.reshape(batch, seq, hidden)
    assert out_b.shape == (batch, seq, hidden)
    assert jnp.allclose(out_b.astype(jnp.float32), ref_b, atol=2e-2, rtol=2e-2), \
        float(jnp.max(jnp.abs(out_b.astype(jnp.float32) - ref_b)))

    print("KERNEL_OK")
</pallas_src>

<mosaic_0001>
module attributes {stable_mosaic.version = 11 : i64} {
  func.func @_llama_mlp_kernel(%arg0: i32, %arg1: i32, %arg2: memref<64x128xf32, #tpu.memory_space<vmem>>, %arg3: memref<128x128xf32, #tpu.memory_space<vmem>>, %arg4: memref<128x128xf32, #tpu.memory_space<vmem>>, %arg5: memref<128x128xf32, #tpu.memory_space<vmem>>, %arg6: memref<64x128xf32, #tpu.memory_space<vmem>>, %arg7: memref<64x128xf32, #tpu.memory_space<vmem>>) attributes {dimension_semantics = [#tpu.dimension_semantics<parallel>, #tpu.dimension_semantics<arbitrary>], iteration_bounds = array<i64: 2, 2>, scalar_prefetch = 0 : i64, scratch_operands = 1 : i64, tpu.core_type = #tpu.core_type<tc>, window_params = [{transform_indices = @transform_0, window_bounds = array<i64: 64, 128>}, {transform_indices = @transform_1, window_bounds = array<i64: 128, 128>}, {transform_indices = @transform_2, window_bounds = array<i64: 128, 128>}, {transform_indices = @transform_3, window_bounds = array<i64: 128, 128>}, {transform_indices = @transform_4, window_bounds = array<i64: 64, 128>}]} {
    %c0_i32 = arith.constant 0 : i32
    %0 = arith.cmpi eq, %arg1, %c0_i32 : i32
    %1 = arith.extui %0 : i1 to i32
    %c0_i32_0 = arith.constant 0 : i32
    %2 = arith.cmpi ne, %1, %c0_i32_0 : i32
    scf.if %2 {
      %cst_17 = arith.constant 0.000000e+00 : f32
      %24 = vector.broadcast %cst_17 : f32 to vector<64x128xf32>
      %c0_18 = arith.constant 0 : index
      %c0_19 = arith.constant 0 : index
      %25 = vector.load %arg7[%c0_18, %c0_19] : memref<64x128xf32, #tpu.memory_space<vmem>>, vector<64x128xf32>
      tpu.vector_store %arg7[%c0_18, %c0_19], %24 {strides = array<i32>} : memref<64x128xf32, #tpu.memory_space<vmem>>, vector<64x128xf32>,
    } else {
    }
    %c0 = arith.constant 0 : index
    %c0_1 = arith.constant 0 : index
    %3 = vector.load %arg2[%c0, %c0_1] : memref<64x128xf32, #tpu.memory_space<vmem>>, vector<64x128xf32>
    %c0_2 = arith.constant 0 : index
    %c0_3 = arith.constant 0 : index
    %4 = vector.load %arg3[%c0_2, %c0_3] : memref<128x128xf32, #tpu.memory_space<vmem>>, vector<128x128xf32>
    %cst = arith.constant dense<0.000000e+00> : vector<64x128xf32>
    %5 = tpu.matmul %3, %4, %cst {dimension_numbers = #tpu.dot_dimension_numbers<[1], [0], [0], [1], [0, 0, 1, 1], [], []>} : vector<64x128xf32>, vector<128x128xf32>, vector<64x128xf32> -> vector<64x128xf32>
    %c0_4 = arith.constant 0 : index
    %c0_5 = arith.constant 0 : index
    %6 = vector.load %arg4[%c0_4, %c0_5] : memref<128x128xf32, #tpu.memory_space<vmem>>, vector<128x128xf32>
    %cst_6 = arith.constant dense<0.000000e+00> : vector<64x128xf32>
    %7 = tpu.matmul %3, %6, %cst_6 {dimension_numbers = #tpu.dot_dimension_numbers<[1], [0], [0], [1], [0, 0, 1, 1], [], []>} : vector<64x128xf32>, vector<128x128xf32>, vector<64x128xf32> -> vector<64x128xf32>
    %cst_7 = arith.constant 0.000000e+00 : f32
    %8 = vector.broadcast %cst_7 : f32 to vector<64x128xf32>
    %9 = arith.subf %8, %5 : vector<64x128xf32>
    %10 = math.exp %9 : vector<64x128xf32>
    %cst_8 = arith.constant 1.000000e+00 : f32
    %11 = vector.broadcast %cst_8 : f32 to vector<64x128xf32>
    %12 = arith.addf %11, %10 : vector<64x128xf32>
    %13 = tpu.reciprocal %12 {approx = true} : vector<64x128xf32> -> vector<64x128xf32>
    %14 = arith.mulf %5, %13 : vector<64x128xf32>
    %15 = arith.mulf %14, %7 : vector<64x128xf32>
    %c0_9 = arith.constant 0 : index
    %c0_10 = arith.constant 0 : index
    %16 = vector.load %arg7[%c0_9, %c0_10] : memref<64x128xf32, #tpu.memory_space<vmem>>, vector<64x128xf32>
    %c0_11 = arith.constant 0 : index
    %c0_12 = arith.constant 0 : index
    %17 = vector.load %arg5[%c0_11, %c0_12] : memref<128x128xf32, #tpu.memory_space<vmem>>, vector<128x128xf32>
    %cst_13 = arith.constant dense<0.000000e+00> : vector<64x128xf32>
    %18 = tpu.matmul %15, %17, %cst_13 {dimension_numbers = #tpu.dot_dimension_numbers<[1], [0], [0], [1], [0, 0, 1, 1], [], []>} : vector<64x128xf32>, vector<128x128xf32>, vector<64x128xf32> -> vector<64x128xf32>
    %19 = arith.addf %16, %18 : vector<64x128xf32>
    %c0_14 = arith.constant 0 : index
    %c0_15 = arith.constant 0 : index
    %20 = vector.load %arg7[%c0_14, %c0_15] : memref<64x128xf32, #tpu.memory_space<vmem>>, vector<64x128xf32>
    tpu.vector_store %arg7[%c0_14, %c0_15], %19 {strides = array<i32>} : memref<64x128xf32, #tpu.memory_space<vmem>>, vector<64x128xf32>,
    %c1_i32 = arith.constant 1 : i32
    %21 = arith.cmpi eq, %arg1, %c1_i32 : i32
    %22 = arith.extui %21 : i1 to i32
    %c0_i32_16 = arith.constant 0 : i32
    %23 = arith.cmpi ne, %22, %c0_i32_16 : i32
    scf.if %23 {
      %c0_17 = arith.constant 0 : index
      %c0_18 = arith.constant 0 : index
      %24 = vector.load %arg7[%c0_17, %c0_18] : memref<64x128xf32, #tpu.memory_space<vmem>>, vector<64x128xf32>
      %c0_19 = arith.constant 0 : index
      %c0_20 = arith.constant 0 : index
      %25 = vector.load %arg6[%c0_19, %c0_20] : memref<64x128xf32, #tpu.memory_space<vmem>>, vector<64x128xf32>
      tpu.vector_store %arg6[%c0_19, %c0_20], %24 {strides = array<i32>} : memref<64x128xf32, #tpu.memory_space<vmem>>, vector<64x128xf32>,
    } else {
    }
    return
  }
  func.func @transform_0(%arg0: i32, %arg1: i32) -> (i32, i32) {
    %c0_i32 = arith.constant 0 : i32
    %c0_i32_0 = arith.constant 0 : i32
    return %arg0, %c0_i32 : i32, i32
  }
  func.func @transform_1(%arg0: i32, %arg1: i32) -> (i32, i32) {
    %c0_i32 = arith.constant 0 : i32
    %c0_i32_0 = arith.constant 0 : i32
    return %c0_i32, %arg1 : i32, i32
  }
  func.func @transform_2(%arg0: i32, %arg1: i32) -> (i32, i32) {
    %c0_i32 = arith.constant 0 : i32
    %c0_i32_0 = arith.constant 0 : i32
    return %c0_i32, %arg1 : i32, i32
  }
  func.func @transform_3(%arg0: i32, %arg1: i32) -> (i32, i32) {
    %c0_i32 = arith.constant 0 : i32
    %c0_i32_0 = arith.constant 0 : i32
    return %arg1, %c0_i32 : i32, i32
  }
  func.func @transform_4(%arg0: i32, %arg1: i32) -> (i32, i32) {
    %c0_i32 = arith.constant 0 : i32
    %c0_i32_0 = arith.constant 0 : i32
    return %arg0, %c0_i32 : i32, i32
  }
}

</mosaic_0001>

<llo_original>
// kernel: tpu_custom_call.1
$region0: #{tpu_custom_call.1}
  #allocation0 [shape = 'u32[]', space=smem, size = 0x4, offset = 0x4, fixed_abs, tag = 'smem constant byte address 0x4 - core index']
  #allocation1 [shape = 'u32[72,128]{1,0:T(1,128)}', space=vmem, size = 0x9000, scoped, tag = 'internal scratch']
  #allocation2 [shape = 'f32[64,128]{1,0:T(8,128)}', space=vmem, size = 0x8000, scoped, tag = 'scratch operand']
  %s0 = inlined_call_operand.hbm [shape: f32[128,128], index: 0, kind: input, shape index: {}]
  %s1 = inlined_call_operand.hbm [shape: f32[128,256], index: 1, kind: input, shape index: {}]
  %s2 = inlined_call_operand.hbm [shape: f32[128,256], index: 2, kind: input, shape index: {}]
  %s3 = inlined_call_operand.hbm [shape: f32[256,128], index: 3, kind: input, shape index: {}]
  %s4 = inlined_call_operand.hbm [shape: f32[128,128], index: 4, kind: output, shape index: {}]
  %s5 = sld [smem:[#allocation0]]
  $region73: #{tpu_custom_call.1} parent=0
    _
  %s7 = ssub.s32 1, %s5
  %s8 = scalar_select 0, %s7, %s5
  $region1: #{tpu_custom_call.1} parent=0
    #allocation3 [shape = 'u8[65536]{0}', space=vmem, size = 0x10000, scoped, tag = 'input window, operand 0']
    #allocation4 [shape = 's32[2]{0}', space=sflag, size = 0x8, scoped, tag = 'scoped memory for tpu_custom_call.1']
    #allocation5 [shape = 's32[2]{0}', space=sflag, size = 0x8, scoped, tag = 'scoped memory for tpu_custom_call.1']
    #allocation6 [shape = 'u8[131072]{0}', space=vmem, size = 0x20000, scoped, tag = 'input window, operand 1']
    #allocation7 [shape = 's32[2]{0}', space=sflag, size = 0x8, scoped, tag = 'scoped memory for tpu_custom_call.1']
    #allocation8 [shape = 'u8[131072]{0}', space=vmem, size = 0x20000, scoped, tag = 'input window, operand 2']
    #allocation9 [shape = 'u8[131072]{0}', space=vmem, size = 0x20000, scoped, tag = 'input window, operand 3']
    #allocation10 [shape = 's32[2]{0}', space=sflag, size = 0x8, scoped, tag = 'scoped memory for tpu_custom_call.1']
    #allocation11 [shape = 'u8[65536]{0}', space=vmem, size = 0x10000, scoped, tag = 'output window, operand 0']
    %9 = vsyncpa [#allocation4], 0
    %s10 = scalar_lea.sflag [#allocation4], 1
    %11 = vsyncpa %s10, 0
    %12 = vsyncpa [#allocation7], 0
    %s13 = scalar_lea.sflag [#allocation7], 1
    %14 = vsyncpa %s13, 0
    %15 = vsyncpa [#allocation10], 0
    %s16 = scalar_lea.sflag [#allocation10], 1
    %17 = vsyncpa %s16, 0
    %18 = vsyncpa [#allocation5], 0
    %s19 = scalar_lea.sflag [#allocation5], 1
    %20 = vsyncpa %s19, 0
    loop: start=0, step=1, limit=6
    $region2: #{tpu_custom_call.1} parent=1 // loop_pre_header
      _
    $region3: #{tpu_custom_call.1} parent=1 // loop_header
      %s22 = sphi 0, %s26
      %p23 = scmp.ge.s32.totalorder %s22, 6
      %s29 = sphi 0, %s41
      %s30 = sphi 0, %s37
      %s31 = sphi 0, %s29
      %s32 = sphi 0, %s30
      %s33 = sphi 0, %s31
      %s34 = sphi 0, %s32
      %s44 = sphi 0, %s46
      %s47 = sphi 0, %s44
      %s48 = sphi 0, %s47
      %s64 = sphi 0, %s48
      %s70 = sphi 0, %s72
      %s73 = sphi 0, %s70
      %s74 = sphi 0, %s73
      %s90 = sphi 0, %s74
      %s96 = sphi 0, %s98
      %s99 = sphi 0, %s96
      %s100 = sphi 0, %s99
      %s116 = sphi 0, %s100
      %s122 = sphi 0, %s124
      %s125 = sphi 0, %s122
      %s126 = sphi 0, %s125
      %s142 = sphi 0, %s126
      %s148 = sphi 0, %s150
      %s151 = sphi 0, %s148
      %s152 = sphi 0, %s151
      %s168 = sphi 0, %s152
    $region4: #{tpu_custom_call.1} parent=1 // loop_header_branch
      %25 = sbr.rel (%p23) target = $region8
    $region5: #{tpu_custom_call.1} parent=1 // loop_body
      %s27 = ssub.s32 %s22, 1
      %s28 = ssub.s32 %s22, 2
      %s35 = sadd.s32 1, %s30
      %p36 = scmp.ge.s32.totalorder %s35, 2
      %s37 = scalar_select %p36, 0, %s35
      %s38 = sadd.s32 1, %s29
      %s39 = scalar_select %p36, %s38, %s29
      %p40 = scmp.ge.s32.totalorder %s39, 2
      %s41 = scalar_select %p40, 0, %s39
      %s42 = ssub.s32 %s29, %s41
      %p43 = scmp.eq.s32.totalorder %s42, 0
      %s45 = sadd.s32 %s44, 1
      %s46 = scalar_select %p43, %s44, %s45
      %p49 = pneg %p43
      %p50 = scmp.eq.s32.totalorder %s22, 3
      %p51 = por %p49, %p50
      %p52 = scmp.ne.s32.totalorder %s44, %s47
      %p53 = scmp.eq.s32.totalorder %s22, 0
      %p54 = por %p52, %p53
      %p55 = scmp.ne.s32.totalorder %s44, %s47
      %p56 = scmp.eq.s32.totalorder %s27, 3
      %p57 = por %p55, %p56
      %p58 = scmp.ne.s32.totalorder %s47, %s48
      %p59 = scmp.eq.s32.totalorder %s27, 0
      %p60 = por %p58, %p59
      %p61 = scmp.ne.s32.totalorder %s47, %s48
      %p62 = scmp.eq.s32.totalorder %s28, 3
      %p63 = por %p61, %p62
      %p65 = scmp.ne.s32.totalorder %s48, %s64
      %p66 = scmp.eq.s32.totalorder %s28, 0
      %p67 = por %p65, %p66
      %s68 = ssub.s32 %s30, %s37
      %p69 = scmp.eq.s32.totalorder %s68, 0
      %s71 = sadd.s32 %s70, 1
      %s72 = scalar_select %p69, %s70, %s71
      %p75 = pneg %p69
      %p76 = scmp.eq.s32.totalorder %s22, 3
      %p77 = por %p75, %p76
      %p78 = scmp.ne.s32.totalorder %s70, %s73
      %p79 = scmp.eq.s32.totalorder %s22, 0
      %p80 = por %p78, %p79
      %p81 = scmp.ne.s32.totalorder %s70, %s73
      %p82 = scmp.eq.s32.totalorder %s27, 3
      %p83 = por %p81, %p82
      %p84 = scmp.ne.s32.totalorder %s73, %s74
      %p85 = scmp.eq.s32.totalorder %s27, 0
      %p86 = por %p84, %p85
      %p87 = scmp.ne.s32.totalorder %s73, %s74
      %p88 = scmp.eq.s32.totalorder %s28, 3
      %p89 = por %p87, %p88
      %p91 = scmp.ne.s32.totalorder %s74, %s90
      %p92 = scmp.eq.s32.totalorder %s28, 0
      %p93 = por %p91, %p92
      %s94 = ssub.s32 %s30, %s37
      %p95 = scmp.eq.s32.totalorder %s94, 0
      %s97 = sadd.s32 %s96, 1
      %s98 = scalar_select %p95, %s96, %s97
      %p101 = pneg %p95
      %p102 = scmp.eq.s32.totalorder %s22, 3
      %p103 = por %p101, %p102
      %p104 = scmp.ne.s32.totalorder %s96, %s99
      %p105 = scmp.eq.s32.totalorder %s22, 0
      %p106 = por %p104, %p105
      %p107 = scmp.ne.s32.totalorder %s96, %s99
      %p108 = scmp.eq.s32.totalorder %s27, 3
      %p109 = por %p107, %p108
      %p110 = scmp.ne.s32.totalorder %s99, %s100
      %p111 = scmp.eq.s32.totalorder %s27, 0
      %p112 = por %p110, %p111
      %p113 = scmp.ne.s32.totalorder %s99, %s100
      %p114 = scmp.eq.s32.totalorder %s28, 3
      %p115 = por %p113, %p114
      %p117 = scmp.ne.s32.totalorder %s100, %s116
      %p118 = scmp.eq.s32.totalorder %s28, 0
      %p119 = por %p117, %p118
      %s120 = ssub.s32 %s30, %s37
      %p121 = scmp.eq.s32.totalorder %s120, 0
      %s123 = sadd.s32 %s122, 1
      %s124 = scalar_select %p121, %s122, %s123
      %p127 = pneg %p121
      %p128 = scmp.eq.s32.totalorder %s22, 3
      %p129 = por %p127, %p128
      %p130 = scmp.ne.s32.totalorder %s122, %s125
      %p131 = scmp.eq.s32.totalorder %s22, 0
      %p132 = por %p130, %p131
      %p133 = scmp.ne.s32.totalorder %s122, %s125
      %p134 = scmp.eq.s32.totalorder %s27, 3
      %p135 = por %p133, %p134
      %p136 = scmp.ne.s32.totalorder %s125, %s126
      %p137 = scmp.eq.s32.totalorder %s27, 0
      %p138 = por %p136, %p137
      %p139 = scmp.ne.s32.totalorder %s125, %s126
      %p140 = scmp.eq.s32.totalorder %s28, 3
      %p141 = por %p139, %p140
      %p143 = scmp.ne.s32.totalorder %s126, %s142
      %p144 = scmp.eq.s32.totalorder %s28, 0
      %p145 = por %p143, %p144
      %s146 = ssub.s32 %s29, %s41
      %p147 = scmp.eq.s32.totalorder %s146, 0
      %s149 = sadd.s32 %s148, 1
      %s150 = scalar_select %p147, %s148, %s149
      %p153 = pneg %p147
      %p154 = scmp.eq.s32.totalorder %s22, 3
      %p155 = por %p153, %p154
      %p156 = scmp.ne.s32.totalorder %s148, %s151
      %p157 = scmp.eq.s32.totalorder %s22, 0
      %p158 = por %p156, %p157
      %p159 = scmp.ne.s32.totalorder %s148, %s151
      %p160 = scmp.eq.s32.totalorder %s27, 3
      %p161 = por %p159, %p160
      %p162 = scmp.ne.s32.totalorder %s151, %s152
      %p163 = scmp.eq.s32.totalorder %s27, 0
      %p164 = por %p162, %p163
      %p165 = scmp.ne.s32.totalorder %s151, %s152
      %p166 = scmp.eq.s32.totalorder %s28, 3
      %p167 = por %p165, %p166
      %p169 = scmp.ne.s32.totalorder %s152, %s168
      %p170 = scmp.eq.s32.totalorder %s28, 0
      %p171 = por %p169, %p170
      %p172 = scmp.le.s32.totalorder 1, %s22
      %p173 = scmp.lt.s32.totalorder %s22, 5
      %p174 = pnand %p172, %p173
      %p175 = pneg %p174
      // Predicated region
      $region9: #{tpu_custom_call.1} parent=5 // pred_check
        _
      $region10: #{tpu_custom_call.1} parent=5 // pred_check_branch
        %177 = sbr.rel (%p174) target = $region12
      $region11: #{tpu_custom_call.1} parent=5 // pred_region
        %s178 = ssub.s32 %s22, 1
      $region12: #{tpu_custom_call.1} parent=5 // pred_fallthru
        _
      %p179 = scmp.lt.s32.totalorder %s22, 4
      // Predicated region
      $region13: #{tpu_custom_call.1} parent=5 // pred_check
        %p180 = pneg %p179
      $region14: #{tpu_custom_call.1} parent=5 // pred_check_branch
        %182 = sbr.rel (%p180) target = $region16
      $region15: #{tpu_custom_call.1} parent=5 // pred_region
        // Predicated region
        $region17: #{tpu_custom_call.1} parent=15 // pred_check
          %p183 = pneg %p54
        $region18: #{tpu_custom_call.1} parent=15 // pred_check_branch
          %185 = sbr.rel (%p183) target = $region20
        $region19: #{tpu_custom_call.1} parent=15 // pred_region
          %s186 = sand.u32 %s44, 1
          %s187 = scalar_lea.sflag [#allocation4], %s186
          %s188 = sand.u32 %s44, 1
          %s189 = smul.addr %s188, 64
          %s190 = scalar_lea.vmem [#allocation3], %s189
          %s191 = smul.u32 8, %s29
          %193 = vsyncadd %s187, 0
          %s194 = smul.addr %s191, 8
          %s195 = scalar_lea.hbm %s0, %s194
          %s196 = sshll.u32 %s195, 4
          %s197 = int_to_ptr.hbm [resolvable:$true] %s196
          %s198 = sshll.u32 %s190, 4
          %s199 = int_to_ptr.vmem [resolvable:$true] %s198
          %204 = dma.hbm_to_vmem [thread:$0]  %s197, 1024, %s199, %s187, 128, 128, 8
        $region20: #{tpu_custom_call.1} parent=15 // pred_fallthru
          _
        // Predicated region
        $region21: #{tpu_custom_call.1} parent=15 // pred_check
          %p205 = pneg %p80
        $region22: #{tpu_custom_call.1} parent=15 // pred_check_branch
          %207 = sbr.rel (%p205) target = $region24
        $region23: #{tpu_custom_call.1} parent=15 // pred_region
          %s208 = sand.u32 %s22, 1
          %s209 = scalar_lea.sflag [#allocation7], %s208
          %s210 = sand.u32 %s70, 1
          %s211 = smul.addr %s210, 128
          %s212 = scalar_lea.vmem [#allocation6], %s211
          %214 = vsyncadd %s209, 0
          %s215 = smul.addr %s30, 8
          %s216 = scalar_lea.hbm %s1, %s215
          %s217 = sshll.u32 %s216, 4
          %s218 = int_to_ptr.hbm [resolvable:$true] %s217
          %s219 = sshll.u32 %s212, 4
          %s220 = int_to_ptr.vmem [resolvable:$true] %s219
          %225 = dma.hbm_to_vmem [thread:$0]  %s218, 2048, %s220, %s209, 256, 128, 8
        $region24: #{tpu_custom_call.1} parent=15 // pred_fallthru
          _
        // Predicated region
        $region25: #{tpu_custom_call.1} parent=15 // pred_check
          %p226 = pneg %p106
        $region26: #{tpu_custom_call.1} parent=15 // pred_check_branch
          %228 = sbr.rel (%p226) target = $region28
        $region27: #{tpu_custom_call.1} parent=15 // pred_region
          %s229 = sand.u32 %s22, 1
          %s230 = scalar_lea.sflag [#allocation7], %s229
          %s231 = sand.u32 %s96, 1
          %s232 = smul.addr %s231, 128
          %s233 = scalar_lea.vmem [#allocation8], %s232
          %235 = vsyncadd %s230, 0
          %s236 = smul.addr %s30, 8
          %s237 = scalar_lea.hbm %s2, %s236
          %s238 = sshll.u32 %s237, 4
          %s239 = int_to_ptr.hbm [resolvable:$true] %s238
          %s240 = sshll.u32 %s233, 4
          %s241 = int_to_ptr.vmem [resolvable:$true] %s240
          %246 = dma.hbm_to_vmem [thread:$0]  %s239, 2048, %s241, %s230, 256, 128, 8
        $region28: #{tpu_custom_call.1} parent=15 // pred_fallthru
          _
        // Predicated region
        $region29: #{tpu_custom_call.1} parent=15 // pred_check
          %p247 = pneg %p132
        $region30: #{tpu_custom_call.1} parent=15 // pred_check_branch
          %249 = sbr.rel (%p247) target = $region32
        $region31: #{tpu_custom_call.1} parent=15 // pred_region
          %s250 = sand.u32 %s122, 1
          %s251 = scalar_lea.sflag [#allocation10], %s250
          %s252 = sand.u32 %s122, 1
          %s253 = smul.addr %s252, 128
          %s254 = scalar_lea.vmem [#allocation9], %s253
          %s255 = smul.u32 16, %s30
          %257 = vsyncadd %s251, 0
          %s258 = smul.addr %s255, 8
          %s259 = scalar_lea.hbm %s3, %s258
          %s260 = sshll.u32 %s259, 4
          %s261 = int_to_ptr.hbm [resolvable:$true] %s260
          %s262 = sshll.u32 %s254, 4
          %s263 = int_to_ptr.vmem [resolvable:$true] %s262
          %268 = dma.hbm_to_vmem [thread:$0]  %s261, 2048, %s263, %s251, 128, 128, 8
        $region32: #{tpu_custom_call.1} parent=15 // pred_fallthru
          _
      $region16: #{tpu_custom_call.1} parent=5 // pred_fallthru
        _
      %p269 = scmp.le.s32.totalorder 1, %s22
      %p270 = scmp.lt.s32.totalorder %s22, 5
      %p271 = pnand %p269, %p270
      %p272 = pneg %p271
      // Predicated region
      $region33: #{tpu_custom_call.1} parent=5 // pred_check
        _
      $region34: #{tpu_custom_call.1} parent=5 // pred_check_branch
        %274 = sbr.rel (%p271) target = $region36
      $region35: #{tpu_custom_call.1} parent=5 // pred_region
        %s275 = ssub.s32 %s22, 1
        %s276 = sand.u32 %s47, 1
        %s277 = scalar_lea.sflag [#allocation4], %s276
        %s278 = sand.u32 %s47, 1
        %s279 = smul.addr %s278, 64
        %s280 = scalar_lea.vmem [#allocation3], %s279
        // Predicated region
        $region37: #{tpu_custom_call.1} parent=35 // pred_check
          %p281 = pneg %p60
        $region38: #{tpu_custom_call.1} parent=35 // pred_check_branch
          %283 = sbr.rel (%p281) target = $region40
        $region39: #{tpu_custom_call.1} parent=35 // pred_region
          %285 = dma.done %s277, 1024
        $region40: #{tpu_custom_call.1} parent=35 // pred_fallthru
          _
        %s286 = sand.u32 %s27, 1
        %s287 = scalar_lea.sflag [#allocation7], %s286
        %s288 = sand.u32 %s73, 1
        %s289 = smul.addr %s288, 128
        %s290 = scalar_lea.vmem [#allocation6], %s289
        // Predicated region
        $region41: #{tpu_custom_call.1} parent=35 // pred_check
          %p291 = pneg %p86
        $region42: #{tpu_custom_call.1} parent=35 // pred_check_branch
          %293 = sbr.rel (%p291) target = $region44
        $region43: #{tpu_custom_call.1} parent=35 // pred_region
          %295 = dma.done %s287, 2048
        $region44: #{tpu_custom_call.1} parent=35 // pred_fallthru
          _
        %s296 = sand.u32 %s27, 1
        %s297 = scalar_lea.sflag [#allocation7], %s296
        %s298 = sand.u32 %s99, 1
        %s299 = smul.addr %s298, 128
        %s300 = scalar_lea.vmem [#allocation8], %s299
        // Predicated region
        $region45: #{tpu_custom_call.1} parent=35 // pred_check
          %p301 = pneg %p112
        $region46: #{tpu_custom_call.1} parent=35 // pred_check_branch
          %303 = sbr.rel (%p301) target = $region48
        $region47: #{tpu_custom_call.1} parent=35 // pred_region
          %305 = dma.done %s297, 2048
        $region48: #{tpu_custom_call.1} parent=35 // pred_fallthru
          _
        %s306 = sand.u32 %s125, 1
        %s307 = scalar_lea.sflag [#allocation10], %s306
        %s308 = sand.u32 %s125, 1
        %s309 = smul.addr %s308, 128
        %s310 = scalar_lea.vmem [#allocation9], %s309
        // Predicated region
        $region49: #{tpu_custom_call.1} parent=35 // pred_check
          %p311 = pneg %p138
        $region50: #{tpu_custom_call.1} parent=35 // pred_check_branch
          %313 = sbr.rel (%p311) target = $region52
        $region51: #{tpu_custom_call.1} parent=35 // pred_region
          %315 = dma.done %s307, 2048
        $region52: #{tpu_custom_call.1} parent=35 // pred_fallthru
          _
        %s316 = sand.u32 %s47, 1
        %s317 = scalar_lea.sflag [#allocation4], %s316
        %s318 = sand.u32 %s47, 1
        %s319 = smul.addr %s318, 64
        %s320 = scalar_lea.vmem [#allocation3], %s319
        %p321 = pneg %p60
        %p322 = pneg %p57
        %s323 = sand.u32 %s27, 1
        %s324 = scalar_lea.sflag [#allocation7], %s323
        %s325 = sand.u32 %s73, 1
        %s326 = smul.addr %s325, 128
        %s327 = scalar_lea.vmem [#allocation6], %s326
        %p328 = pneg %p86
        %p329 = pneg %p83
        %s330 = sand.u32 %s27, 1
        %s331 = scalar_lea.sflag [#allocation7], %s330
        %s332 = sand.u32 %s99, 1
        %s333 = smul.addr %s332, 128
        %s334 = scalar_lea.vmem [#allocation8], %s333
        %p335 = pneg %p112
        %p336 = pneg %p109
        %s337 = sand.u32 %s125, 1
        %s338 = scalar_lea.sflag [#allocation10], %s337
        %s339 = sand.u32 %s125, 1
        %s340 = smul.addr %s339, 128
        %s341 = scalar_lea.vmem [#allocation9], %s340
        %p342 = pneg %p138
        %p343 = pneg %p135
        %p344 = pneg %p164
        %p345 = pneg %p161
        %s346 = sand.u32 %s151, 1
        %s347 = scalar_lea.sflag [#allocation5], %s346
        %s348 = sand.u32 %s151, 1
        %s349 = smul.addr %s348, 64
        %s350 = scalar_lea.vmem [#allocation11], %s349
        %s351 = smul.u32 8, %s31
        %s352 = smul.u32 16, %s32
        %s353 = smul.u32 8, %s31
        %p354 = scmp.eq.s32.totalorder %s32, 0
        // Predicated region
        $region53: #{tpu_custom_call.1} parent=35 // pred_check
          %p355 = pneg %p354
        $region54: #{tpu_custom_call.1} parent=35 // pred_check_branch
          %357 = sbr.rel (%p355) target = $region56
        $region55: #{tpu_custom_call.1} parent=35 // pred_region
          %358 = vst [vmem:[#allocation2] sm:$0xff] 0.0
          %359 = vst [vmem:[#allocation2 + $0x8] sm:$0xff] 0.0
          %360 = vst [vmem:[#allocation2 + $0x10] sm:$0xff] 0.0
          %361 = vst [vmem:[#allocation2 + $0x18] sm:$0xff] 0.0
          %362 = vst [vmem:[#allocation2 + $0x20] sm:$0xff] 0.0
          %363 = vst [vmem:[#allocation2 + $0x28] sm:$0xff] 0.0
          %364 = vst [vmem:[#allocation2 + $0x30] sm:$0xff] 0.0
          %365 = vst [vmem:[#allocation2 + $0x38] sm:$0xff] 0.0
        $region56: #{tpu_custom_call.1} parent=35 // pred_fallthru
          _
        %v366 = vld [vmem:[%s280] sm:$0xff]
        %v367 = vld [vmem:[%s280 + $0x8] sm:$0xff]
        %v368 = vld [vmem:[%s280 + $0x10] sm:$0xff]
        %v369 = vld [vmem:[%s280 + $0x18] sm:$0xff]
        %v370 = vld [vmem:[%s280 + $0x20] sm:$0xff]
        %v371 = vld [vmem:[%s280 + $0x28] sm:$0xff]
        %v372 = vld [vmem:[%s280 + $0x30] sm:$0xff]
        %v373 = vld [vmem:[%s280 + $0x38] sm:$0xff]
        %v374 = vld [vmem:[%s290] sm:$0xff]
        %v375 = vld [vmem:[%s290 + $0x8] sm:$0xff]
        %v376 = vld [vmem:[%s290 + $0x10] sm:$0xff]
        %v377 = vld [vmem:[%s290 + $0x18] sm:$0xff]
        %v378 = vld [vmem:[%s290 + $0x20] sm:$0xff]
        %v379 = vld [vmem:[%s290 + $0x28] sm:$0xff]
        %v380 = vld [vmem:[%s290 + $0x30] sm:$0xff]
        %v381 = vld [vmem:[%s290 + $0x38] sm:$0xff]
        %v382 = vld [vmem:[%s290 + $0x40] sm:$0xff]
        %v383 = vld [vmem:[%s290 + $0x48] sm:$0xff]
        %v384 = vld [vmem:[%s290 + $0x50] sm:$0xff]
        %v385 = vld [vmem:[%s290 + $0x58] sm:$0xff]
        %v386 = vld [vmem:[%s290 + $0x60] sm:$0xff]
        %v387 = vld [vmem:[%s290 + $0x68] sm:$0xff]
        %v388 = vld [vmem:[%s290 + $0x70] sm:$0xff]
        %v389 = vld [vmem:[%s290 + $0x78] sm:$0xff]
        %390 = vmatpush.msra.mxu0 %v389
        %391 = vmatpush.msra.mxu0 %v388
        %392 = vmatpush.msra.mxu0 %v387
        %393 = vmatpush.msra.mxu0 %v386
        %394 = vmatpush.msra.mxu0 %v385
        %395 = vmatpush.msra.mxu0 %v384
        %396 = vmatpush.msra.mxu0 %v383
        %397 = vmatpush.msra.mxu0 %v382
        %398 = vmatpush.msra.mxu0 %v381
        %399 = vmatpush.msra.mxu0 %v380
        %400 = vmatpush.msra.mxu0 %v379
        %401 = vmatpush.msra.mxu0 %v378
        %402 = vmatpush.msra.mxu0 %v377
        %403 = vmatpush.msra.mxu0 %v376
        %404 = vmatpush.msra.mxu0 %v375
        %405 = vmatpush.msra.mxu0 %v374
        %406 = vmatmul.f32.gmra.mxu0 %v366
        %v407 = vpop.f32.mrf.mxu0
        %v408 = vadd.f32 0.0, %v407
        %409 = vmatmul.f32.gmra.mxu0 %v367
        %v410 = vpop.f32.mrf.mxu0
        %v411 = vadd.f32 0.0, %v410
        %412 = vmatmul.f32.gmra.mxu0 %v368
        %v413 = vpop.f32.mrf.mxu0
        %v414 = vadd.f32 0.0, %v413
        %415 = vmatmul.f32.gmra.mxu0 %v369
        %v416 = vpop.f32.mrf.mxu0
        %v417 = vadd.f32 0.0, %v416
        %418 = vmatmul.f32.gmra.mxu0 %v370
        %v419 = vpop.f32.mrf.mxu0
        %v420 = vadd.f32 0.0, %v419
        %421 = vmatmul.f32.gmra.mxu0 %v371
        %v422 = vpop.f32.mrf.mxu0
        %v423 = vadd.f32 0.0, %v422
        %424 = vmatmul.f32.gmra.mxu0 %v372
        %v425 = vpop.f32.mrf.mxu0
        %v426 = vadd.f32 0.0, %v425
        %427 = vmatmul.f32.gmra.mxu0 %v373
        %v428 = vpop.f32.mrf.mxu0
        %v429 = vadd.f32 0.0, %v428
        %430 = vdwg.mxu0
        %v431 = vld [vmem:[%s300] sm:$0xff]
        %v432 = vld [vmem:[%s300 + $0x8] sm:$0xff]
        %v433 = vld [vmem:[%s300 + $0x10] sm:$0xff]
        %v434 = vld [vmem:[%s300 + $0x18] sm:$0xff]
        %v435 = vld [vmem:[%s300 + $0x20] sm:$0xff]
        %v436 = vld [vmem:[%s300 + $0x28] sm:$0xff]
        %v437 = vld [vmem:[%s300 + $0x30] sm:$0xff]
        %v438 = vld [vmem:[%s300 + $0x38] sm:$0xff]
        %v439 = vld [vmem:[%s300 + $0x40] sm:$0xff]
        %v440 = vld [vmem:[%s300 + $0x48] sm:$0xff]
        %v441 = vld [vmem:[%s300 + $0x50] sm:$0xff]
        %v442 = vld [vmem:[%s300 + $0x58] sm:$0xff]
        %v443 = vld [vmem:[%s300 + $0x60] sm:$0xff]
        %v444 = vld [vmem:[%s300 + $0x68] sm:$0xff]
        %v445 = vld [vmem:[%s300 + $0x70] sm:$0xff]
        %v446 = vld [vmem:[%s300 + $0x78] sm:$0xff]
        %447 = vmatpush.msra.mxu0 %v446
        %448 = vmatpush.msra.mxu0 %v445
        %449 = vmatpush.msra.mxu0 %v444
        %450 = vmatpush.msra.mxu0 %v443
        %451 = vmatpush.msra.mxu0 %v442
        %452 = vmatpush.msra.mxu0 %v441
        %453 = vmatpush.msra.mxu0 %v440
        %454 = vmatpush.msra.mxu0 %v439
        %455 = vmatpush.msra.mxu0 %v438
        %456 = vmatpush.msra.mxu0 %v437
        %457 = vmatpush.msra.mxu0 %v436
        %458 = vmatpush.msra.mxu0 %v435
        %459 = vmatpush.msra.mxu0 %v434
        %460 = vmatpush.msra.mxu0 %v433
        %461 = vmatpush.msra.mxu0 %v432
        %462 = vmatpush.msra.mxu0 %v431
        %463 = vmatmul.f32.gmra.mxu0 %v366
        %v464 = vpop.f32.mrf.mxu0
        %v465 = vadd.f32 0.0, %v464
        %466 = vmatmul.f32.gmra.mxu0 %v367
        %v467 = vpop.f32.mrf.mxu0
        %v468 = vadd.f32 0.0, %v467
        %469 = vmatmul.f32.gmra.mxu0 %v368
        %v470 = vpop.f32.mrf.mxu0
        %v471 = vadd.f32 0.0, %v470
        %472 = vmatmul.f32.gmra.mxu0 %v369
        %v473 = vpop.f32.mrf.mxu0
        %v474 = vadd.f32 0.0, %v473
        %475 = vmatmul.f32.gmra.mxu0 %v370
        %v476 = vpop.f32.mrf.mxu0
        %v477 = vadd.f32 0.0, %v476
        %478 = vmatmul.f32.gmra.mxu0 %v371
        %v479 = vpop.f32.mrf.mxu0
        %v480 = vadd.f32 0.0, %v479
        %481 = vmatmul.f32.gmra.mxu0 %v372
        %v482 = vpop.f32.mrf.mxu0
        %v483 = vadd.f32 0.0, %v482
        %484 = vmatmul.f32.gmra.mxu0 %v373
        %v485 = vpop.f32.mrf.mxu0
        %v486 = vadd.f32 0.0, %v485
        %487 = vdwg.mxu0
        %v488 = vsub.f32 0.0, %v408
        %v489 = vsub.f32 0.0, %v411
        %v490 = vsub.f32 0.0, %v414
        %v491 = vsub.f32 0.0, %v417
        %v492 = vsub.f32 0.0, %v420
        %v493 = vsub.f32 0.0, %v423
        %v494 = vsub.f32 0.0, %v426
        %v495 = vsub.f32 0.0, %v429
        %v496 = vmul.f32 %v488, 1.442695
        %v497 = vpow.pop %v496
        %v498 = vmul.f32 %v489, 1.442695
        %v499 = vpow.pop %v498
        %v500 = vmul.f32 %v490, 1.442695
        %v501 = vpow.pop %v500
        %v502 = vmul.f32 %v491, 1.442695
        %v503 = vpow.pop %v502
        %v504 = vmul.f32 %v492, 1.442695
        %v505 = vpow.pop %v504
        %v506 = vmul.f32 %v493, 1.442695
        %v507 = vpow.pop %v506
        %v508 = vmul.f32 %v494, 1.442695
        %v509 = vpow.pop %v508
        %v510 = vmul.f32 %v495, 1.442695
        %v511 = vpow.pop %v510
        %v512 = vadd.f32 %v497, 1.0
        %v513 = vadd.f32 %v499, 1.0
        %v514 = vadd.f32 %v501, 1.0
        %v515 = vadd.f32 %v503, 1.0
        %v516 = vadd.f32 %v505, 1.0
        %v517 = vadd.f32 %v507, 1.0
        %v518 = vadd.f32 %v509, 1.0
        %v519 = vadd.f32 %v511, 1.0
        %v520 = vrcp.pop %v512
        %v521 = vrcp.pop %v513
        %v522 = vrcp.pop %v514
        %v523 = vrcp.pop %v515
        %v524 = vrcp.pop %v516
        %v525 = vrcp.pop %v517
        %v526 = vrcp.pop %v518
        %v527 = vrcp.pop %v519
        %v528 = vmul.f32 %v408, %v520
        %v529 = vmul.f32 %v411, %v521
        %v530 = vmul.f32 %v414, %v522
        %v531 = vmul.f32 %v417, %v523
        %v532 = vmul.f32 %v420, %v524
        %v533 = vmul.f32 %v423, %v525
        %v534 = vmul.f32 %v426, %v526
        %v535 = vmul.f32 %v429, %v527
        %v536 = vmul.f32 %v528, %v465
        %v537 = vmul.f32 %v529, %v468
        %v538 = vmul.f32 %v530, %v471
        %v539 = vmul.f32 %v531, %v474
        %v540 = vmul.f32 %v532, %v477
        %v541 = vmul.f32 %v533, %v480
        %v542 = vmul.f32 %v534, %v483
        %v543 = vmul.f32 %v535, %v486
        %v544 = vld [vmem:[#allocation2] sm:$0xff]
        %v545 = vld [vmem:[#allocation2 + $0x8] sm:$0xff]
        %v546 = vld [vmem:[#allocation2 + $0x10] sm:$0xff]
        %v547 = vld [vmem:[#allocation2 + $0x18] sm:$0xff]
        %v548 = vld [vmem:[#allocation2 + $0x20] sm:$0xff]
        %v549 = vld [vmem:[#allocation2 + $0x28] sm:$0xff]
        %v550 = vld [vmem:[#allocation2 + $0x30] sm:$0xff]
        %v551 = vld [vmem:[#allocation2 + $0x38] sm:$0xff]
        %v552 = vld [vmem:[%s310] sm:$0xff]
        %v553 = vld [vmem:[%s310 + $0x8] sm:$0xff]
        %v554 = vld [vmem:[%s310 + $0x10] sm:$0xff]
        %v555 = vld [vmem:[%s310 + $0x18] sm:$0xff]
        %v556 = vld [vmem:[%s310 + $0x20] sm:$0xff]
        %v557 = vld [vmem:[%s310 + $0x28] sm:$0xff]
        %v558 = vld [vmem:[%s310 + $0x30] sm:$0xff]
        %v559 = vld [vmem:[%s310 + $0x38] sm:$0xff]
        %v560 = vld [vmem:[%s310 + $0x40] sm:$0xff]
        %v561 = vld [vmem:[%s310 + $0x48] sm:$0xff]
        %v562 = vld [vmem:[%s310 + $0x50] sm:$0xff]
        %v563 = vld [vmem:[%s310 + $0x58] sm:$0xff]
        %v564 = vld [vmem:[%s310 + $0x60] sm:$0xff]
        %v565 = vld [vmem:[%s310 + $0x68] sm:$0xff]
        %v566 = vld [vmem:[%s310 + $0x70] sm:$0xff]
        %v567 = vld [vmem:[%s310 + $0x78] sm:$0xff]
        %568 = vmatpush.msra.mxu0 %v567
        %569 = vmatpush.msra.mxu0 %v566
        %570 = vmatpush.msra.mxu0 %v565
        %571 = vmatpush.msra.mxu0 %v564
        %572 = vmatpush.msra.mxu0 %v563
        %573 = vmatpush.msra.mxu0 %v562
        %574 = vmatpush.msra.mxu0 %v561
        %575 = vmatpush.msra.mxu0 %v560
        %576 = vmatpush.msra.mxu0 %v559
        %577 = vmatpush.msra.mxu0 %v558
        %578 = vmatpush.msra.mxu0 %v557
        %579 = vmatpush.msra.mxu0 %v556
        %580 = vmatpush.msra.mxu0 %v555
        %581 = vmatpush.msra.mxu0 %v554
        %582 = vmatpush.msra.mxu0 %v553
        %583 = vmatpush.msra.mxu0 %v552
        %584 = vmatmul.f32.gmra.mxu0 %v536
        %v585 = vpop.f32.mrf.mxu0
        %v586 = vadd.f32 0.0, %v585
        %587 = vmatmul.f32.gmra.mxu0 %v537
        %v588 = vpop.f32.mrf.mxu0
        %v589 = vadd.f32 0.0, %v588
        %590 = vmatmul.f32.gmra.mxu0 %v538
        %v591 = vpop.f32.mrf.mxu0
        %v592 = vadd.f32 0.0, %v591
        %593 = vmatmul.f32.gmra.mxu0 %v539
        %v594 = vpop.f32.mrf.mxu0
        %v595 = vadd.f32 0.0, %v594
        %596 = vmatmul.f32.gmra.mxu0 %v540
        %v597 = vpop.f32.mrf.mxu0
        %v598 = vadd.f32 0.0, %v597
        %599 = vmatmul.f32.gmra.mxu0 %v541
        %v600 = vpop.f32.mrf.mxu0
        %v601 = vadd.f32 0.0, %v600
        %602 = vmatmul.f32.gmra.mxu0 %v542
        %v603 = vpop.f32.mrf.mxu0
        %v604 = vadd.f32 0.0, %v603
        %605 = vmatmul.f32.gmra.mxu0 %v543
        %v606 = vpop.f32.mrf.mxu0
        %v607 = vadd.f32 0.0, %v606
        %608 = vdwg.mxu0
        %v609 = vadd.f32 %v544, %v586
        %v610 = vadd.f32 %v545, %v589
        %v611 = vadd.f32 %v546, %v592
        %v612 = vadd.f32 %v547, %v595
        %v613 = vadd.f32 %v548, %v598
        %v614 = vadd.f32 %v549, %v601
        %v615 = vadd.f32 %v550, %v604
        %v616 = vadd.f32 %v551, %v607
        %617 = vst [vmem:[#allocation2] sm:$0xff] %v609
        %618 = vst [vmem:[#allocation2 + $0x8] sm:$0xff] %v610
        %619 = vst [vmem:[#allocation2 + $0x10] sm:$0xff] %v611
        %620 = vst [vmem:[#allocation2 + $0x18] sm:$0xff] %v612
        %621 = vst [vmem:[#allocation2 + $0x20] sm:$0xff] %v613
        %622 = vst [vmem:[#allocation2 + $0x28] sm:$0xff] %v614
        %623 = vst [vmem:[#allocation2 + $0x30] sm:$0xff] %v615
        %624 = vst [vmem:[#allocation2 + $0x38] sm:$0xff] %v616
        %p625 = scmp.eq.s32.totalorder %s32, 1
        // Predicated region
        $region57: #{tpu_custom_call.1} parent=35 // pred_check
          %p626 = pneg %p625
        $region58: #{tpu_custom_call.1} parent=35 // pred_check_branch
          %628 = sbr.rel (%p626) target = $region60
        $region59: #{tpu_custom_call.1} parent=35 // pred_region
          %v629 = vld [vmem:[#allocation2] sm:$0xff]
          %v630 = vld [vmem:[#allocation2 + $0x8] sm:$0xff]
          %v631 = vld [vmem:[#allocation2 + $0x10] sm:$0xff]
          %v632 = vld [vmem:[#allocation2 + $0x18] sm:$0xff]
          %v633 = vld [vmem:[#allocation2 + $0x20] sm:$0xff]
          %v634 = vld [vmem:[#allocation2 + $0x28] sm:$0xff]
          %v635 = vld [vmem:[#allocation2 + $0x30] sm:$0xff]
          %v636 = vld [vmem:[#allocation2 + $0x38] sm:$0xff]
          %637 = vst [vmem:[%s350] sm:$0xff] %v629
          %638 = vst [vmem:[%s350 + $0x8] sm:$0xff] %v630
          %639 = vst [vmem:[%s350 + $0x10] sm:$0xff] %v631
          %640 = vst [vmem:[%s350 + $0x18] sm:$0xff] %v632
          %641 = vst [vmem:[%s350 + $0x20] sm:$0xff] %v633
          %642 = vst [vmem:[%s350 + $0x28] sm:$0xff] %v634
          %643 = vst [vmem:[%s350 + $0x30] sm:$0xff] %v635
          %644 = vst [vmem:[%s350 + $0x38] sm:$0xff] %v636
        $region60: #{tpu_custom_call.1} parent=35 // pred_fallthru
          _
        %s645 = sand.u32 %s151, 1
        %s646 = scalar_lea.sflag [#allocation5], %s645
        %s647 = sand.u32 %s151, 1
        %s648 = smul.addr %s647, 64
        %s649 = scalar_lea.vmem [#allocation11], %s648
        // Predicated region
        $region61: #{tpu_custom_call.1} parent=35 // pred_check
          %p650 = pneg %p161
        $region62: #{tpu_custom_call.1} parent=35 // pred_check_branch
          %652 = sbr.rel (%p650) target = $region64
        $region63: #{tpu_custom_call.1} parent=35 // pred_region
          %s653 = smul.u32 8, %s31
          %655 = vsyncadd %s646, 0
          %s656 = smul.addr %s653, 8
          %s657 = scalar_lea.hbm %s4, %s656
          %s658 = sshll.u32 %s649, 4
          %s659 = int_to_ptr.vmem [resolvable:$true] %s658
          %s660 = sshll.u32 %s657, 4
          %s661 = int_to_ptr.hbm [resolvable:$true] %s660
          %666 = dma.vmem_to_hbm [thread:$0]  %s659, 1024, %s661, %s646, 128, 128, 8
        $region64: #{tpu_custom_call.1} parent=35 // pred_fallthru
          _
      $region36: #{tpu_custom_call.1} parent=5 // pred_fallthru
        _
      %p667 = scmp.le.s32.totalorder 2, %s22
      // Predicated region
      $region65: #{tpu_custom_call.1} parent=5 // pred_check
        %p668 = pneg %p667
      $region66: #{tpu_custom_call.1} parent=5 // pred_check_branch
        %670 = sbr.rel (%p668) target = $region68
      $region67: #{tpu_custom_call.1} parent=5 // pred_region
        %s671 = ssub.s32 %s22, 2
        // Predicated region
        $region69: #{tpu_custom_call.1} parent=67 // pred_check
          %p672 = pneg %p167
        $region70: #{tpu_custom_call.1} parent=67 // pred_check_branch
          %674 = sbr.rel (%p672) target = $region72
        $region71: #{tpu_custom_call.1} parent=67 // pred_region
          %s675 = sand.u32 %s152, 1
          %s676 = scalar_lea.sflag [#allocation5], %s675
          %s677 = sand.u32 %s152, 1
          %s678 = smul.addr %s677, 64
          %s679 = scalar_lea.vmem [#allocation11], %s678
          %681 = dma.done %s676, 1024
        $region72: #{tpu_custom_call.1} parent=67 // pred_fallthru
          _
      $region68: #{tpu_custom_call.1} parent=5 // pred_fallthru
        _
    $region6: #{tpu_custom_call.1} parent=1 // loop_footer
      %s26 = sadd.s32 1, %s22
    $region7: #{tpu_custom_call.1} parent=1 // loop_footer_branch
      %21 = sbr.rel target = $region3
    $region8: #{tpu_custom_call.1} parent=1 // loop_exit
      _
    %682 = vsyncpa [#allocation4], 1
    %s683 = scalar_lea.sflag [#allocation4], 1
    %684 = vsyncpa %s683, 1
    %685 = vsyncpa [#allocation7], 1
    %s686 = scalar_lea.sflag [#allocation7], 1
    %687 = vsyncpa %s686, 1
    %688 = vsyncpa [#allocation10], 1
    %s689 = scalar_lea.sflag [#allocation10], 1
    %690 = vsyncpa %s689, 1
    %691 = vsyncpa [#allocation5], 1
    %s692 = scalar_lea.sflag [#allocation5], 1
    %693 = vsyncpa %s692, 1

</llo_original>
